<compile_context>
chip_gen: v6e
topology: v6e:2x2x1
jax: 0.10.0
libtpu: 0.0.40
codegen_flags: <defaults>
</compile_context>

<pallas_src>
import functools
import math

import numpy as np
import jax
import jax.numpy as jnp
from jax.experimental import pallas as pl
from jax.experimental.pallas import tpu as pltpu

LANE = 128  # TPU lane width; feature dims are padded to this.


def _round_up(x, m):
    return (x + m - 1) // m * m


def _pad2d(x, rows, cols):
    r, c = x.shape
    return jnp.pad(x, ((0, rows - r), (0, cols - c)))


def sage_block_kernel(a_ref, src_ref, self_ref, ws_ref, wn_ref, b_ref, *rest,
                      apply_relu, apply_fc):
    """One GraphSAGE('mean') layer tile.

    grid axis 0 (parallel): destination-node row tiles.
    grid axis 1 (arbitrary): reduction over source-node tiles of A_norm @ X.
    """
    if apply_fc:
        wfc_ref, bfc_ref, o_ref, acc_ref = rest
    else:
        o_ref, acc_ref = rest

    k = pl.program_id(1)

    @pl.when(k == 0)
    def _():
        acc_ref[...] = jnp.zeros_like(acc_ref)

    # Mean aggregation: bf16 adjacency tile @ bf16 source-feature tile, f32 acc.
    acc_ref[...] += jnp.dot(a_ref[...], src_ref[...],
                            preferred_element_type=jnp.float32)

    @pl.when(k == pl.num_programs(1) - 1)
    def _():
        # Self + neighbor projections as two dots (no concat copy), f32 epilogue.
        h = (jnp.dot(self_ref[...].astype(jnp.float32), ws_ref[...],
                     preferred_element_type=jnp.float32)
             + jnp.dot(acc_ref[...], wn_ref[...],
                       preferred_element_type=jnp.float32)
             + b_ref[...])
        if apply_relu:
            h = jnp.maximum(h, 0.0)
        if apply_fc:
            h = jnp.dot(h, wfc_ref[...],
                        preferred_element_type=jnp.float32) + bfc_ref[...]
        o_ref[...] = h.astype(o_ref.dtype)


def _sage_layer(a_p, feat_p, w_self, w_neigh, b, *, out_dim, out_dtype,
                apply_relu, fc=None, tm=128, tk=128):
    n_pad = a_p.shape[0]
    f_in = feat_p.shape[1]

    in_specs = [
        pl.BlockSpec((tm, tk), lambda i, k: (i, k)),        # A_norm tile
        pl.BlockSpec((tk, f_in), lambda i, k: (k, 0)),      # source features
        pl.BlockSpec((tm, f_in), lambda i, k: (i, 0)),      # self features (per i)
        pl.BlockSpec(w_self.shape, lambda i, k: (0, 0)),    # W_self (resident)
        pl.BlockSpec(w_neigh.shape, lambda i, k: (0, 0)),   # W_neigh (resident)
        pl.BlockSpec(b.shape, lambda i, k: (0, 0)),         # bias (resident)
    ]
    args = [a_p, feat_p, feat_p, w_self, w_neigh, b]
    if fc is not None:
        wfc, bfc = fc
        in_specs += [pl.BlockSpec(wfc.shape, lambda i, k: (0, 0)),
                     pl.BlockSpec(bfc.shape, lambda i, k: (0, 0))]
        args += [wfc, bfc]

    kernel = functools.partial(sage_block_kernel,
                               apply_relu=apply_relu,
                               apply_fc=fc is not None)

    return pl.pallas_call(
        kernel,
        out_shape=jax.ShapeDtypeStruct((n_pad, out_dim), out_dtype),
        grid_spec=pltpu.PrefetchScalarGridSpec(
            num_scalar_prefetch=0,
            grid=(n_pad // tm, n_pad // tk),
            in_specs=in_specs,
            out_specs=pl.BlockSpec((tm, out_dim), lambda i, k: (i, 0)),
            scratch_shapes=[pltpu.VMEM((tm, f_in), jnp.float32)],
        ),
        compiler_params=pltpu.CompilerParams(
            dimension_semantics=("parallel", "arbitrary"),
            vmem_limit_bytes=32 * 1024 * 1024,
        ),
    )(*args)


def collaborative_filtering_forward(item_embeds, a_norm, params, *,
                                    tm=128, tk=128):
    n, in_feats = item_embeds.shape
    h_feats = params["w1_self"].shape[1]

    f_pad = _round_up(in_feats, LANE)
    h_pad = _round_up(h_feats, LANE)
    n_pad = _round_up(n, math.lcm(tm, tk))

    # Lane-dense zero-padded operands: padded rows/cols of A and X are zero, so
    # padding never contaminates real rows; padded output rows/lanes get
    # sliced off at the end.
    x_p = _pad2d(item_embeds, n_pad, f_pad).astype(jnp.bfloat16)
    a_p = _pad2d(a_norm, n_pad, n_pad).astype(jnp.bfloat16)

    w1_self = _pad2d(params["w1_self"], f_pad, h_pad)
    w1_neigh = _pad2d(params["w1_neigh"], f_pad, h_pad)
    b1 = _pad2d(params["b1"], 1, h_pad)
    w2_self = _pad2d(params["w2_self"], h_pad, h_pad)
    w2_neigh = _pad2d(params["w2_neigh"], h_pad, h_pad)
    b2 = _pad2d(params["b2"], 1, h_pad)
    w_fc = _pad2d(params["w_fc"], h_pad, f_pad)
    b_fc = _pad2d(params["b_fc"], 1, f_pad)

    # Layer 1: SAGEConv('mean') + ReLU; h1 stored bf16 (it is the bf16 MXU
    # operand of the next layer's aggregation anyway).
    h1 = _sage_layer(a_p, x_p, w1_self, w1_neigh, b1,
                     out_dim=h_pad, out_dtype=jnp.bfloat16,
                     apply_relu=True, tm=tm, tk=tk)
    # Layer 2: SAGEConv('mean') fused with the final Linear; f32 epilogue/out.
    out_p = _sage_layer(a_p, h1, w2_self, w2_neigh, b2,
                        out_dim=f_pad, out_dtype=jnp.float32,
                        apply_relu=False, fc=(w_fc, b_fc), tm=tm, tk=tk)
    return out_p[:n, :in_feats]


def build_mean_adjacency(src, dst, num_nodes):
    """Dense row-normalized adjacency: A[d, s] = edge count, rows / max(deg, 1)."""
    a = np.zeros((num_nodes, num_nodes), dtype=np.float32)
    for s, d in zip(src, dst):
        a[d, s] += 1.0
    deg = a.sum(axis=1, keepdims=True)
    a = a / np.maximum(deg, 1.0)
    return jnp.asarray(a)


def init_params(key, num_items, in_feats, h_feats):
    ks = jax.random.split(key, 9)
    scale = 0.1
    return {
        "embed":    scale * jax.random.normal(ks[0], (num_items, in_feats), jnp.float32),
        "w1_self":  scale * jax.random.normal(ks[1], (in_feats, h_feats), jnp.float32),
        "w1_neigh": scale * jax.random.normal(ks[2], (in_feats, h_feats), jnp.float32),
        "b1":       scale * jax.random.normal(ks[3], (1, h_feats), jnp.float32),
        "w2_self":  scale * jax.random.normal(ks[4], (h_feats, h_feats), jnp.float32),
        "w2_neigh": scale * jax.random.normal(ks[5], (h_feats, h_feats), jnp.float32),
        "b2":       scale * jax.random.normal(ks[6], (1, h_feats), jnp.float32),
        "w_fc":     scale * jax.random.normal(ks[7], (h_feats, in_feats), jnp.float32),
        "b_fc":     scale * jax.random.normal(ks[8], (1, in_feats), jnp.float32),
    }


if __name__ == "__main__":
    num_items = 16   # graph nodes / items
    in_feats = 8
    h_feats = 32

    key = jax.random.PRNGKey(0)
    params = init_params(key, num_items, in_feats, h_feats)

    # Small deterministic graph (edge list src -> dst).
    rng = np.random.RandomState(0)
    n_edges = 48
    src = rng.randint(0, num_items, size=n_edges)
    dst = rng.randint(0, num_items, size=n_edges)
    a_norm = build_mean_adjacency(src, dst, num_items)

    # Embedding lookup for every node (glue, outside the kernel).
    item_ids = jnp.arange(num_items, dtype=jnp.int32)
    item_embeds = jnp.take(params["embed"], item_ids, axis=0)  # [N, in_feats]

    out = collaborative_filtering_forward(item_embeds, a_norm, params)
    out = jax.block_until_ready(out)

    # Pure-JAX f32 reference of the same math.
    def ref(x, a, p):
        h1 = jnp.maximum(x @ p["w1_self"] + (a @ x) @ p["w1_neigh"] + p["b1"], 0.0)
        h2 = h1 @ p["w2_self"] + (a @ h1) @ p["w2_neigh"] + p["b2"]
        return h2 @ p["w_fc"] + p["b_fc"]

    expected = ref(item_embeds, a_norm, params)
    assert out.shape == (num_items, in_feats)
    # Tolerance relaxed vs pure-f32 because the aggregation operands (A, X, h1)
    # are bf16 on the MXU (accumulation stays f32).
    np.testing.assert_allclose(np.asarray(out), np.asarray(expected),
                               rtol=2e-2, atol=2e-2)

    print("KERNEL_OK")
</pallas_src>

<mosaic_0001>
module attributes {stable_mosaic.version = 11 : i64} {
  func.func @sage_block_kernel(%arg0: i32, %arg1: i32, %arg2: memref<128x128xbf16, #tpu.memory_space<vmem>>, %arg3: memref<128x128xbf16, #tpu.memory_space<vmem>>, %arg4: memref<128x128xbf16, #tpu.memory_space<vmem>>, %arg5: memref<128x128xf32, #tpu.memory_space<vmem>>, %arg6: memref<128x128xf32, #tpu.memory_space<vmem>>, %arg7: memref<1x128xf32, #tpu.memory_space<vmem>>, %arg8: memref<128x128xbf16, #tpu.memory_space<vmem>>, %arg9: memref<128x128xf32, #tpu.memory_space<vmem>>) attributes {dimension_semantics = [#tpu.dimension_semantics<parallel>, #tpu.dimension_semantics<arbitrary>], iteration_bounds = array<i64: 1, 1>, scalar_prefetch = 0 : i64, scratch_operands = 1 : i64, tpu.core_type = #tpu.core_type<tc>, window_params = [{transform_indices = @transform_0, window_bounds = array<i64: 128, 128>}, {transform_indices = @transform_1, window_bounds = array<i64: 128, 128>}, {transform_indices = @transform_2, window_bounds = array<i64: 128, 128>}, {pipeline_mode = #tpu.pipeline_mode<synchronous>, transform_indices = @transform_3, window_bounds = array<i64: 128, 128>}, {pipeline_mode = #tpu.pipeline_mode<synchronous>, transform_indices = @transform_4, window_bounds = array<i64: 128, 128>}, {pipeline_mode = #tpu.pipeline_mode<synchronous>, transform_indices = @transform_5, window_bounds = array<i64: 1, 128>}, {transform_indices = @transform_6, window_bounds = array<i64: 128, 128>}]} {
    %c0_i32 = arith.constant 0 : i32
    %0 = arith.cmpi eq, %arg1, %c0_i32 : i32
    %1 = arith.extui %0 : i1 to i32
    %c0_i32_0 = arith.constant 0 : i32
    %2 = arith.cmpi ne, %1, %c0_i32_0 : i32
    scf.if %2 {
      %cst_10 = arith.constant 0.000000e+00 : f32
      %12 = vector.broadcast %cst_10 : f32 to vector<128x128xf32>
      %c0_11 = arith.constant 0 : index
      %c0_12 = arith.constant 0 : index
      %13 = vector.load %arg9[%c0_11, %c0_12] : memref<128x128xf32, #tpu.memory_space<vmem>>, vector<128x128xf32>
      tpu.vector_store %arg9[%c0_11, %c0_12], %12 {strides = array<i32>} : memref<128x128xf32, #tpu.memory_space<vmem>>, vector<128x128xf32>,
    } else {
    }
    %c0 = arith.constant 0 : index
    %c0_1 = arith.constant 0 : index
    %3 = vector.load %arg9[%c0, %c0_1] : memref<128x128xf32, #tpu.memory_space<vmem>>, vector<128x128xf32>
    %c0_2 = arith.constant 0 : index
    %c0_3 = arith.constant 0 : index
    %4 = vector.load %arg2[%c0_2, %c0_3] : memref<128x128xbf16, #tpu.memory_space<vmem>>, vector<128x128xbf16>
    %c0_4 = arith.constant 0 : index
    %c0_5 = arith.constant 0 : index
    %5 = vector.load %arg3[%c0_4, %c0_5] : memref<128x128xbf16, #tpu.memory_space<vmem>>, vector<128x128xbf16>
    %cst = arith.constant dense<0.000000e+00> : vector<128x128xf32>
    %6 = tpu.matmul %4, %5, %cst {dimension_numbers = #tpu.dot_dimension_numbers<[1], [0], [0], [1], [0, 0, 1, 1], [], []>} : vector<128x128xbf16>, vector<128x128xbf16>, vector<128x128xf32> -> vector<128x128xf32>
    %7 = arith.addf %3, %6 : vector<128x128xf32>
    %c0_6 = arith.constant 0 : index
    %c0_7 = arith.constant 0 : index
    %8 = vector.load %arg9[%c0_6, %c0_7] : memref<128x128xf32, #tpu.memory_space<vmem>>, vector<128x128xf32>
    tpu.vector_store %arg9[%c0_6, %c0_7], %7 {strides = array<i32>} : memref<128x128xf32, #tpu.memory_space<vmem>>, vector<128x128xf32>,
    %c0_i32_8 = arith.constant 0 : i32
    %9 = arith.cmpi eq, %arg1, %c0_i32_8 : i32
    %10 = arith.extui %9 : i1 to i32
    %c0_i32_9 = arith.constant 0 : i32
    %11 = arith.cmpi ne, %10, %c0_i32_9 : i32
    scf.if %11 {
      %c0_10 = arith.constant 0 : index
      %c0_11 = arith.constant 0 : index
      %12 = vector.load %arg4[%c0_10, %c0_11] : memref<128x128xbf16, #tpu.memory_space<vmem>>, vector<128x128xbf16>
      %13 = arith.extf %12 : vector<128x128xbf16> to vector<128x128xf32>
      %c0_12 = arith.constant 0 : index
      %c0_13 = arith.constant 0 : index
      %14 = vector.load %arg5[%c0_12, %c0_13] : memref<128x128xf32, #tpu.memory_space<vmem>>, vector<128x128xf32>
      %cst_14 = arith.constant dense<0.000000e+00> : vector<128x128xf32>
      %15 = tpu.matmul %13, %14, %cst_14 {dimension_numbers = #tpu.dot_dimension_numbers<[1], [0], [0], [1], [0, 0, 1, 1], [], []>} : vector<128x128xf32>, vector<128x128xf32>, vector<128x128xf32> -> vector<128x128xf32>
      %c0_15 = arith.constant 0 : index
      %c0_16 = arith.constant 0 : index
      %16 = vector.load %arg9[%c0_15, %c0_16] : memref<128x128xf32, #tpu.memory_space<vmem>>, vector<128x128xf32>
      %c0_17 = arith.constant 0 : index
      %c0_18 = arith.constant 0 : index
      %17 = vector.load %arg6[%c0_17, %c0_18] : memref<128x128xf32, #tpu.memory_space<vmem>>, vector<128x128xf32>
      %cst_19 = arith.constant dense<0.000000e+00> : vector<128x128xf32>
      %18 = tpu.matmul %16, %17, %cst_19 {dimension_numbers = #tpu.dot_dimension_numbers<[1], [0], [0], [1], [0, 0, 1, 1], [], []>} : vector<128x128xf32>, vector<128x128xf32>, vector<128x128xf32> -> vector<128x128xf32>
      %19 = arith.addf %15, %18 : vector<128x128xf32>
      %c0_20 = arith.constant 0 : index
      %c0_21 = arith.constant 0 : index
      %20 = vector.load %arg7[%c0_20, %c0_21] : memref<1x128xf32, #tpu.memory_space<vmem>>, vector<1x128xf32>
      %21 = vector.broadcast %20 : vector<1x128xf32> to vector<128x128xf32>
      %22 = arith.addf %19, %21 : vector<128x128xf32>
      %cst_22 = arith.constant 0.000000e+00 : f32
      %23 = vector.broadcast %cst_22 : f32 to vector<128x128xf32>
      %24 = arith.maximumf %22, %23 : vector<128x128xf32>
      %25 = arith.truncf %24 : vector<128x128xf32> to vector<128x128xbf16>
      %c0_23 = arith.constant 0 : index
      %c0_24 = arith.constant 0 : index
      %26 = vector.load %arg8[%c0_23, %c0_24] : memref<128x128xbf16, #tpu.memory_space<vmem>>, vector<128x128xbf16>
      tpu.vector_store %arg8[%c0_23, %c0_24], %25 {strides = array<i32>} : memref<128x128xbf16, #tpu.memory_space<vmem>>, vector<128x128xbf16>,
    } else {
    }
    return
  }
  func.func @transform_0(%arg0: i32, %arg1: i32) -> (i32, i32) {
    %c0_i32 = arith.constant 0 : i32
    return %arg0, %arg1 : i32, i32
  }
  func.func @transform_1(%arg0: i32, %arg1: i32) -> (i32, i32) {
    %c0_i32 = arith.constant 0 : i32
    %c0_i32_0 = arith.constant 0 : i32
    return %arg1, %c0_i32 : i32, i32
  }
  func.func @transform_2(%arg0: i32, %arg1: i32) -> (i32, i32) {
    %c0_i32 = arith.constant 0 : i32
    %c0_i32_0 = arith.constant 0 : i32
    return %arg0, %c0_i32 : i32, i32
  }
  func.func @transform_3(%arg0: i32, %arg1: i32) -> (i32, i32) {
    %c0_i32 = arith.constant 0 : i32
    %c0_i32_0 = arith.constant 0 : i32
    %c0_i32_1 = arith.constant 0 : i32
    return %c0_i32, %c0_i32_0 : i32, i32
  }
  func.func @transform_4(%arg0: i32, %arg1: i32) -> (i32, i32) {
    %c0_i32 = arith.constant 0 : i32
    %c0_i32_0 = arith.constant 0 : i32
    %c0_i32_1 = arith.constant 0 : i32
    return %c0_i32, %c0_i32_0 : i32, i32
  }
  func.func @transform_5(%arg0: i32, %arg1: i32) -> (i32, i32) {
    %c0_i32 = arith.constant 0 : i32
    %c0_i32_0 = arith.constant 0 : i32
    %c0_i32_1 = arith.constant 0 : i32
    return %c0_i32, %c0_i32_0 : i32, i32
  }
  func.func @transform_6(%arg0: i32, %arg1: i32) -> (i32, i32) {
    %c0_i32 = arith.constant 0 : i32
    %c0_i32_0 = arith.constant 0 : i32
    return %arg0, %c0_i32 : i32, i32
  }
}

</mosaic_0001>

<llo_original>
// kernel: tpu_custom_call.1
$region0: #{tpu_custom_call.1}
  #allocation0 [shape = 'u32[]', space=smem, size = 0x4, offset = 0x4, fixed_abs, tag = 'smem constant byte address 0x4 - core index']
  #allocation1 [shape = 'u32[144,128]{1,0:T(1,128)}', space=vmem, size = 0x12000, scoped, tag = 'internal scratch']
  #allocation2 [shape = 'f32[128,128]{1,0:T(8,128)}', space=vmem, size = 0x10000, scoped, tag = 'scratch operand']
  %s0 = inlined_call_operand.hbm [shape: bf16[128,128], index: 0, kind: input, shape index: {}]
  %s1 = inlined_call_operand.hbm [shape: bf16[128,128], index: 1, kind: input, shape index: {}]
  %s2 = inlined_call_operand.hbm [shape: bf16[128,128], index: 2, kind: input, shape index: {}]
  %s3 = inlined_call_operand.hbm [shape: f32[128,128], index: 3, kind: input, shape index: {}]
  %s4 = inlined_call_operand.hbm [shape: f32[128,128], index: 4, kind: input, shape index: {}]
  %s5 = inlined_call_operand.vmem [shape: f32[1,128], index: 5, kind: input, shape index: {}]
  %s6 = inlined_call_operand.hbm [shape: bf16[128,128], index: 6, kind: output, shape index: {}]
  %s7 = sld [smem:[#allocation0]]
  $region62: #{tpu_custom_call.1} parent=0
    _
  %s9 = ssub.s32 1, %s7
  %s10 = scalar_select 0, %s9, %s7
  $region1: #{tpu_custom_call.1} parent=0
    #allocation3 [shape = 'u8[32768]{0}', space=vmem, size = 0x8000, scoped, tag = 'input window, operand 0, single buffered']
    #allocation4 [shape = 's32[1]{0}', space=sflag, size = 0x4, scoped, tag = 'scoped memory for tpu_custom_call.1']
    #allocation5 [shape = 's32[1]{0}', space=sflag, size = 0x4, scoped, tag = 'scoped memory for tpu_custom_call.1']
    #allocation6 [shape = 'u8[32768]{0}', space=vmem, size = 0x8000, scoped, tag = 'input window, operand 1, single buffered']
    #allocation7 [shape = 's32[1]{0}', space=sflag, size = 0x4, scoped, tag = 'scoped memory for tpu_custom_call.1']
    #allocation8 [shape = 'u8[32768]{0}', space=vmem, size = 0x8000, scoped, tag = 'input window, operand 2, single buffered']
    #allocation9 [shape = 'u8[65536]{0}', space=vmem, size = 0x10000, scoped, tag = 'input window, operand 3, single buffered']
    #allocation10 [shape = 's32[1]{0}', space=sflag, size = 0x4, scoped, tag = 'scoped memory for tpu_custom_call.1']
    #allocation11 [shape = 'u8[65536]{0}', space=vmem, size = 0x10000, scoped, tag = 'input window, operand 4, single buffered']
    #allocation12 [shape = 'u8[32768]{0}', space=vmem, size = 0x8000, scoped, tag = 'output window, operand 0, single buffered']
    %11 = vsyncpa [#allocation4], 0
    %12 = vsyncpa [#allocation7], 0
    %13 = vsyncpa [#allocation10], 0
    %14 = vsyncpa [#allocation5], 0
    // Predicated region
    $region2: #{tpu_custom_call.1} parent=1 // pred_check
      _
    $region3: #{tpu_custom_call.1} parent=1 // pred_check_branch
      %16 = sbr.rel (0) target = $region5
    $region4: #{tpu_custom_call.1} parent=1 // pred_region
      %s18 = ssub.s32 1024, 1024
      %19 = vsyncadd [#allocation4], %s18
      %s20 = sshll.u32 [#allocation3], 4
      %s21 = int_to_ptr.vmem [resolvable:$true] %s20
      %26 = dma.hbm_to_vmem [thread:$0]  %s0, 1024, %s21, [#allocation4], 64, 64, 4
    $region5: #{tpu_custom_call.1} parent=1 // pred_fallthru
      _
    // Predicated region
    $region6: #{tpu_custom_call.1} parent=1 // pred_check
      _
    $region7: #{tpu_custom_call.1} parent=1 // pred_check_branch
      %28 = sbr.rel (0) target = $region9
    $region8: #{tpu_custom_call.1} parent=1 // pred_region
      %s30 = ssub.s32 1024, 1024
      %31 = vsyncadd [#allocation7], %s30
      %s32 = sshll.u32 [#allocation6], 4
      %s33 = int_to_ptr.vmem [resolvable:$true] %s32
      %38 = dma.hbm_to_vmem [thread:$0]  %s1, 1024, %s33, [#allocation7], 64, 64, 4
    $region9: #{tpu_custom_call.1} parent=1 // pred_fallthru
      _
    // Predicated region
    $region10: #{tpu_custom_call.1} parent=1 // pred_check
      _
    $region11: #{tpu_custom_call.1} parent=1 // pred_check_branch
      %40 = sbr.rel (0) target = $region13
    $region12: #{tpu_custom_call.1} parent=1 // pred_region
      %s42 = ssub.s32 1024, 1024
      %43 = vsyncadd [#allocation7], %s42
      %s44 = sshll.u32 [#allocation8], 4
      %s45 = int_to_ptr.vmem [resolvable:$true] %s44
      %50 = dma.hbm_to_vmem [thread:$0]  %s2, 1024, %s45, [#allocation7], 64, 64, 4
    $region13: #{tpu_custom_call.1} parent=1 // pred_fallthru
      _
    // Predicated region
    $region14: #{tpu_custom_call.1} parent=1 // pred_check
      _
    $region15: #{tpu_custom_call.1} parent=1 // pred_check_branch
      %52 = sbr.rel (0) target = $region17
    $region16: #{tpu_custom_call.1} parent=1 // pred_region
      %s54 = ssub.s32 2048, 2048
      %55 = vsyncadd [#allocation10], %s54
      %s56 = sshll.u32 [#allocation9], 4
      %s57 = int_to_ptr.vmem [resolvable:$true] %s56
      %62 = dma.hbm_to_vmem [thread:$0]  %s3, 2048, %s57, [#allocation10], 128, 128, 8
    $region17: #{tpu_custom_call.1} parent=1 // pred_fallthru
      _
    // Predicated region
    $region18: #{tpu_custom_call.1} parent=1 // pred_check
      _
    $region19: #{tpu_custom_call.1} parent=1 // pred_check_branch
      %64 = sbr.rel (0) target = $region21
    $region20: #{tpu_custom_call.1} parent=1 // pred_region
      %s66 = ssub.s32 2048, 2048
      %67 = vsyncadd [#allocation10], %s66
      %s68 = sshll.u32 [#allocation11], 4
      %s69 = int_to_ptr.vmem [resolvable:$true] %s68
      %74 = dma.hbm_to_vmem [thread:$0]  %s4, 2048, %s69, [#allocation10], 128, 128, 8
    $region21: #{tpu_custom_call.1} parent=1 // pred_fallthru
      _
    // Predicated region
    $region22: #{tpu_custom_call.1} parent=1 // pred_check
      _
    $region23: #{tpu_custom_call.1} parent=1 // pred_check_branch
      %76 = sbr.rel (0) target = $region25
    $region24: #{tpu_custom_call.1} parent=1 // pred_region
      _
    $region25: #{tpu_custom_call.1} parent=1 // pred_fallthru
      _
    // Predicated region
    $region26: #{tpu_custom_call.1} parent=1 // pred_check
      _
    $region27: #{tpu_custom_call.1} parent=1 // pred_check_branch
      %78 = sbr.rel (0) target = $region29
    $region28: #{tpu_custom_call.1} parent=1 // pred_region
      %79 = dma.done [#allocation4], 1024
    $region29: #{tpu_custom_call.1} parent=1 // pred_fallthru
      _
    // Predicated region
    $region30: #{tpu_custom_call.1} parent=1 // pred_check
      _
    $region31: #{tpu_custom_call.1} parent=1 // pred_check_branch
      %81 = sbr.rel (0) target = $region33
    $region32: #{tpu_custom_call.1} parent=1 // pred_region
      %82 = dma.done [#allocation7], 1024
    $region33: #{tpu_custom_call.1} parent=1 // pred_fallthru
      _
    // Predicated region
    $region34: #{tpu_custom_call.1} parent=1 // pred_check
      _
    $region35: #{tpu_custom_call.1} parent=1 // pred_check_branch
      %84 = sbr.rel (0) target = $region37
    $region36: #{tpu_custom_call.1} parent=1 // pred_region
      %85 = dma.done [#allocation7], 1024
    $region37: #{tpu_custom_call.1} parent=1 // pred_fallthru
      _
    // Predicated region
    $region38: #{tpu_custom_call.1} parent=1 // pred_check
      _
    $region39: #{tpu_custom_call.1} parent=1 // pred_check_branch
      %87 = sbr.rel (0) target = $region41
    $region40: #{tpu_custom_call.1} parent=1 // pred_region
      %88 = dma.done [#allocation10], 2048
    $region41: #{tpu_custom_call.1} parent=1 // pred_fallthru
      _
    // Predicated region
    $region42: #{tpu_custom_call.1} parent=1 // pred_check
      _
    $region43: #{tpu_custom_call.1} parent=1 // pred_check_branch
      %90 = sbr.rel (0) target = $region45
    $region44: #{tpu_custom_call.1} parent=1 // pred_region
      %91 = dma.done [#allocation10], 2048
    $region45: #{tpu_custom_call.1} parent=1 // pred_fallthru
      _
    %p93 = scmp.eq.s32.totalorder 0, 0
    // Predicated region
    $region46: #{tpu_custom_call.1} parent=1 // pred_check
      %p94 = pneg %p93
    $region47: #{tpu_custom_call.1} parent=1 // pred_check_branch
      %96 = sbr.rel (%p94) target = $region49
    $region48: #{tpu_custom_call.1} parent=1 // pred_region
      %97 = vst [vmem:[#allocation2] sm:$0xff] 0.0
      %98 = vst [vmem:[#allocation2 + $0x8] sm:$0xff] 0.0
      %99 = vst [vmem:[#allocation2 + $0x10] sm:$0xff] 0.0
      %100 = vst [vmem:[#allocation2 + $0x18] sm:$0xff] 0.0
      %101 = vst [vmem:[#allocation2 + $0x20] sm:$0xff] 0.0
      %102 = vst [vmem:[#allocation2 + $0x28] sm:$0xff] 0.0
      %103 = vst [vmem:[#allocation2 + $0x30] sm:$0xff] 0.0
      %104 = vst [vmem:[#allocation2 + $0x38] sm:$0xff] 0.0
      %105 = vst [vmem:[#allocation2 + $0x40] sm:$0xff] 0.0
      %106 = vst [vmem:[#allocation2 + $0x48] sm:$0xff] 0.0
      %107 = vst [vmem:[#allocation2 + $0x50] sm:$0xff] 0.0
      %108 = vst [vmem:[#allocation2 + $0x58] sm:$0xff] 0.0
      %109 = vst [vmem:[#allocation2 + $0x60] sm:$0xff] 0.0
      %110 = vst [vmem:[#allocation2 + $0x68] sm:$0xff] 0.0
      %111 = vst [vmem:[#allocation2 + $0x70] sm:$0xff] 0.0
      %112 = vst [vmem:[#allocation2 + $0x78] sm:$0xff] 0.0
    $region49: #{tpu_custom_call.1} parent=1 // pred_fallthru
      _
    %v113 = vld [vmem:[#allocation2] sm:$0xff]
    %v114 = vld [vmem:[#allocation2 + $0x8] sm:$0xff]
    %v115 = vld [vmem:[#allocation2 + $0x10] sm:$0xff]
    %v116 = vld [vmem:[#allocation2 + $0x18] sm:$0xff]
    %v117 = vld [vmem:[#allocation2 + $0x20] sm:$0xff]
    %v118 = vld [vmem:[#allocation2 + $0x28] sm:$0xff]
    %v119 = vld [vmem:[#allocation2 + $0x30] sm:$0xff]
    %v120 = vld [vmem:[#allocation2 + $0x38] sm:$0xff]
    %v121 = vld [vmem:[#allocation2 + $0x40] sm:$0xff]
    %v122 = vld [vmem:[#allocation2 + $0x48] sm:$0xff]
    %v123 = vld [vmem:[#allocation2 + $0x50] sm:$0xff]
    %v124 = vld [vmem:[#allocation2 + $0x58] sm:$0xff]
    %v125 = vld [vmem:[#allocation2 + $0x60] sm:$0xff]
    %v126 = vld [vmem:[#allocation2 + $0x68] sm:$0xff]
    %v127 = vld [vmem:[#allocation2 + $0x70] sm:$0xff]
    %v128 = vld [vmem:[#allocation2 + $0x78] sm:$0xff]
    %v129 = vld [vmem:[#allocation3] sm:$0xf]
    %v130 = vld [vmem:[#allocation3 + $0x4] sm:$0xf]
    %v131 = vld [vmem:[#allocation3 + $0x8] sm:$0xf]
    %v132 = vld [vmem:[#allocation3 + $0xc] sm:$0xf]
    %v133 = vld [vmem:[#allocation3 + $0x10] sm:$0xf]
    %v134 = vld [vmem:[#allocation3 + $0x14] sm:$0xf]
    %v135 = vld [vmem:[#allocation3 + $0x18] sm:$0xf]
    %v136 = vld [vmem:[#allocation3 + $0x1c] sm:$0xf]
    %v137 = vld [vmem:[#allocation3 + $0x20] sm:$0xf]
    %v138 = vld [vmem:[#allocation3 + $0x24] sm:$0xf]
    %v139 = vld [vmem:[#allocation3 + $0x28] sm:$0xf]
    %v140 = vld [vmem:[#allocation3 + $0x2c] sm:$0xf]
    %v141 = vld [vmem:[#allocation3 + $0x30] sm:$0xf]
    %v142 = vld [vmem:[#allocation3 + $0x34] sm:$0xf]
    %v143 = vld [vmem:[#allocation3 + $0x38] sm:$0xf]
    %v144 = vld [vmem:[#allocation3 + $0x3c] sm:$0xf]
    %v145 = vld [vmem:[#allocation6] sm:$0xf]
    %v146 = vld [vmem:[#allocation6 + $0x4] sm:$0xf]
    %v147 = vld [vmem:[#allocation6 + $0x8] sm:$0xf]
    %v148 = vld [vmem:[#allocation6 + $0xc] sm:$0xf]
    %v149 = vld [vmem:[#allocation6 + $0x10] sm:$0xf]
    %v150 = vld [vmem:[#allocation6 + $0x14] sm:$0xf]
    %v151 = vld [vmem:[#allocation6 + $0x18] sm:$0xf]
    %v152 = vld [vmem:[#allocation6 + $0x1c] sm:$0xf]
    %v153 = vld [vmem:[#allocation6 + $0x20] sm:$0xf]
    %v154 = vld [vmem:[#allocation6 + $0x24] sm:$0xf]
    %v155 = vld [vmem:[#allocation6 + $0x28] sm:$0xf]
    %v156 = vld [vmem:[#allocation6 + $0x2c] sm:$0xf]
    %v157 = vld [vmem:[#allocation6 + $0x30] sm:$0xf]
    %v158 = vld [vmem:[#allocation6 + $0x34] sm:$0xf]
    %v159 = vld [vmem:[#allocation6 + $0x38] sm:$0xf]
    %v160 = vld [vmem:[#allocation6 + $0x3c] sm:$0xf]
    %v177 = vunpack.c.l.b16 %v129
    %v178 = vunpack.c.l.b16 %v130
    %v179 = vunpack.c.l.b16 %v131
    %v180 = vunpack.c.l.b16 %v132
    %v181 = vunpack.c.l.b16 %v133
    %v182 = vunpack.c.l.b16 %v134
    %v183 = vunpack.c.l.b16 %v135
    %v184 = vunpack.c.l.b16 %v136
    %v185 = vunpack.c.l.b16 %v137
    %v186 = vunpack.c.l.b16 %v138
    %v187 = vunpack.c.l.b16 %v139
    %v188 = vunpack.c.l.b16 %v140
    %v189 = vunpack.c.l.b16 %v141
    %v190 = vunpack.c.l.b16 %v142
    %v191 = vunpack.c.l.b16 %v143
    %v192 = vunpack.c.l.b16 %v144
    %v193 = vpack.c.b16 %v178, %v177
    %v194 = vpack.c.b16 %v180, %v179
    %v195 = vpack.c.b16 %v182, %v181
    %v196 = vpack.c.b16 %v184, %v183
    %v197 = vpack.c.b16 %v186, %v185
    %v198 = vpack.c.b16 %v188, %v187
    %v199 = vpack.c.b16 %v190, %v189
    %v200 = vpack.c.b16 %v192, %v191
    %v225 = vunpack.c.l.b16 %v145
    %v226 = vunpack.c.l.b16 %v146
    %v227 = vunpack.c.l.b16 %v147
    %v228 = vunpack.c.l.b16 %v148
    %v229 = vunpack.c.l.b16 %v149
    %v230 = vunpack.c.l.b16 %v150
    %v231 = vunpack.c.l.b16 %v151
    %v232 = vunpack.c.l.b16 %v152
    %v233 = vunpack.c.l.b16 %v153
    %v234 = vunpack.c.l.b16 %v154
    %v235 = vunpack.c.l.b16 %v155
    %v236 = vunpack.c.l.b16 %v156
    %v237 = vunpack.c.l.b16 %v157
    %v238 = vunpack.c.l.b16 %v158
    %v239 = vunpack.c.l.b16 %v159
    %v240 = vunpack.c.l.b16 %v160
    %v241 = vpack.c.b16 %v226, %v225
    %v242 = vpack.c.b16 %v228, %v227
    %v243 = vpack.c.b16 %v230, %v229
    %v244 = vpack.c.b16 %v232, %v231
    %v245 = vpack.c.b16 %v234, %v233
    %v246 = vpack.c.b16 %v236, %v235
    %v247 = vpack.c.b16 %v238, %v237
    %v248 = vpack.c.b16 %v240, %v239
    %257 = vmatprep.subr.bf16.mxu0 0
    %258 = vmatpush1.bf16.msra.mxu0 %v248
    %259 = vmatprep.subr.bf16.mxu0 0
    %260 = vmatpush1.bf16.msra.mxu0 %v247
    %261 = vmatprep.subr.bf16.mxu0 0
    %262 = vmatpush1.bf16.msra.mxu0 %v246
    %263 = vmatprep.subr.bf16.mxu0 0
    %264 = vmatpush1.bf16.msra.mxu0 %v245
    %265 = vmatprep.subr.bf16.mxu0 0
    %266 = vmatpush1.bf16.msra.mxu0 %v244
    %267 = vmatprep.subr.bf16.mxu0 0
    %268 = vmatpush1.bf16.msra.mxu0 %v243
    %269 = vmatprep.subr.bf16.mxu0 0
    %270 = vmatpush1.bf16.msra.mxu0 %v242
    %271 = vmatprep.subr.bf16.mxu0 0
    %272 = vmatpush1.bf16.msra.mxu0 %v241
    %273 = vmatprep.subr.bf16.mxu0 0
    %274 = vmatpush2.bf16.msra.mxu0 0
    %275 = vmatprep.subr.bf16.mxu0 0
    %276 = vmatpush2.bf16.msra.mxu0 0
    %277 = vmatprep.subr.bf16.mxu0 0
    %278 = vmatpush2.bf16.msra.mxu0 0
    %279 = vmatprep.subr.bf16.mxu0 0
    %280 = vmatpush2.bf16.msra.mxu0 0
    %281 = vmatprep.subr.bf16.mxu0 0
    %282 = vmatpush2.bf16.msra.mxu0 0
    %283 = vmatprep.subr.bf16.mxu0 0
    %284 = vmatpush2.bf16.msra.mxu0 0
    %285 = vmatprep.subr.bf16.mxu0 0
    %286 = vmatpush2.bf16.msra.mxu0 0
    %287 = vmatprep.subr.bf16.mxu0 0
    %288 = vmatpush2.bf16.msra.mxu0 0
    %289 = vmatprep.mubr.bf16.mxu0 0
    %290 = vmatmul.mubr.bf16.gmra.mxu0 %v193
    %v291 = vpop.f32.mrf.mxu0
    %v292 = vadd.f32 0.0, %v291
    %v293 = vpop.f32.mrf.mxu0
    %v294 = vpop.f32.mrf.mxu0
    %v295 = vadd.f32 0.0, %v294
    %v296 = vpop.f32.mrf.mxu0
    %297 = vmatprep.mubr.bf16.mxu0 0
    %298 = vmatmul.mubr.bf16.gmra.mxu0 %v194
    %v299 = vpop.f32.mrf.mxu0
    %v300 = vadd.f32 0.0, %v299
    %v301 = vpop.f32.mrf.mxu0
    %v302 = vpop.f32.mrf.mxu0
    %v303 = vadd.f32 0.0, %v302
    %v304 = vpop.f32.mrf.mxu0
    %305 = vmatprep.mubr.bf16.mxu0 0
    %306 = vmatmul.mubr.bf16.gmra.mxu0 %v195
    %v307 = vpop.f32.mrf.mxu0
    %v308 = vadd.f32 0.0, %v307
    %v309 = vpop.f32.mrf.mxu0
    %v310 = vpop.f32.mrf.mxu0
    %v311 = vadd.f32 0.0, %v310
    %v312 = vpop.f32.mrf.mxu0
    %313 = vmatprep.mubr.bf16.mxu0 0
    %314 = vmatmul.mubr.bf16.gmra.mxu0 %v196
    %v315 = vpop.f32.mrf.mxu0
    %v316 = vadd.f32 0.0, %v315
    %v317 = vpop.f32.mrf.mxu0
    %v318 = vpop.f32.mrf.mxu0
    %v319 = vadd.f32 0.0, %v318
    %v320 = vpop.f32.mrf.mxu0
    %321 = vmatprep.mubr.bf16.mxu0 0
    %322 = vmatmul.mubr.bf16.gmra.mxu0 %v197
    %v323 = vpop.f32.mrf.mxu0
    %v324 = vadd.f32 0.0, %v323
    %v325 = vpop.f32.mrf.mxu0
    %v326 = vpop.f32.mrf.mxu0
    %v327 = vadd.f32 0.0, %v326
    %v328 = vpop.f32.mrf.mxu0
    %329 = vmatprep.mubr.bf16.mxu0 0
    %330 = vmatmul.mubr.bf16.gmra.mxu0 %v198
    %v331 = vpop.f32.mrf.mxu0
    %v332 = vadd.f32 0.0, %v331
    %v333 = vpop.f32.mrf.mxu0
    %v334 = vpop.f32.mrf.mxu0
    %v335 = vadd.f32 0.0, %v334
    %v336 = vpop.f32.mrf.mxu0
    %337 = vmatprep.mubr.bf16.mxu0 0
    %338 = vmatmul.mubr.bf16.gmra.mxu0 %v199
    %v339 = vpop.f32.mrf.mxu0
    %v340 = vadd.f32 0.0, %v339
    %v341 = vpop.f32.mrf.mxu0
    %v342 = vpop.f32.mrf.mxu0
    %v343 = vadd.f32 0.0, %v342
    %v344 = vpop.f32.mrf.mxu0
    %345 = vmatprep.mubr.bf16.mxu0 0
    %346 = vmatmul.mubr.bf16.gmra.mxu0 %v200
    %v347 = vpop.f32.mrf.mxu0
    %v348 = vadd.f32 0.0, %v347
    %v349 = vpop.f32.mrf.mxu0
    %v350 = vpop.f32.mrf.mxu0
    %v351 = vadd.f32 0.0, %v350
    %v352 = vpop.f32.mrf.mxu0
    %353 = vdwg.mxu0
    %v354 = vadd.f32 %v113, %v292
    %v355 = vadd.f32 %v114, %v295
    %v356 = vadd.f32 %v115, %v300
    %v357 = vadd.f32 %v116, %v303
    %v358 = vadd.f32 %v117, %v308
    %v359 = vadd.f32 %v118, %v311
    %v360 = vadd.f32 %v119, %v316
    %v361 = vadd.f32 %v120, %v319
    %v362 = vadd.f32 %v121, %v324
    %v363 = vadd.f32 %v122, %v327
    %v364 = vadd.f32 %v123, %v332
    %v365 = vadd.f32 %v124, %v335
    %v366 = vadd.f32 %v125, %v340
    %v367 = vadd.f32 %v126, %v343
    %v368 = vadd.f32 %v127, %v348
    %v369 = vadd.f32 %v128, %v351
    %370 = vst [vmem:[#allocation2] sm:$0xff] %v354
    %371 = vst [vmem:[#allocation2 + $0x8] sm:$0xff] %v355
    %372 = vst [vmem:[#allocation2 + $0x10] sm:$0xff] %v356
    %373 = vst [vmem:[#allocation2 + $0x18] sm:$0xff] %v357
    %374 = vst [vmem:[#allocation2 + $0x20] sm:$0xff] %v358
    %375 = vst [vmem:[#allocation2 + $0x28] sm:$0xff] %v359
    %376 = vst [vmem:[#allocation2 + $0x30] sm:$0xff] %v360
    %377 = vst [vmem:[#allocation2 + $0x38] sm:$0xff] %v361
    %378 = vst [vmem:[#allocation2 + $0x40] sm:$0xff] %v362
    %379 = vst [vmem:[#allocation2 + $0x48] sm:$0xff] %v363
    %380 = vst [vmem:[#allocation2 + $0x50] sm:$0xff] %v364
    %381 = vst [vmem:[#allocation2 + $0x58] sm:$0xff] %v365
    %382 = vst [vmem:[#allocation2 + $0x60] sm:$0xff] %v366
    %383 = vst [vmem:[#allocation2 + $0x68] sm:$0xff] %v367
    %384 = vst [vmem:[#allocation2 + $0x70] sm:$0xff] %v368
    %385 = vst [vmem:[#allocation2 + $0x78] sm:$0xff] %v369
    // Predicated region
    $region50: #{tpu_custom_call.1} parent=1 // pred_check
      %p386 = pneg %p93
    $region51: #{tpu_custom_call.1} parent=1 // pred_check_branch
      %388 = sbr.rel (%p386) target = $region53
    $region52: #{tpu_custom_call.1} parent=1 // pred_region
      %v389 = vld [vmem:[#allocation8] sm:$0xf]
      %v390 = vld [vmem:[#allocation8 + $0x4] sm:$0xf]
      %v391 = vld [vmem:[#allocation8 + $0x8] sm:$0xf]
      %v392 = vld [vmem:[#allocation8 + $0xc] sm:$0xf]
      %v393 = vld [vmem:[#allocation8 + $0x10] sm:$0xf]
      %v394 = vld [vmem:[#allocation8 + $0x14] sm:$0xf]
      %v395 = vld [vmem:[#allocation8 + $0x18] sm:$0xf]
      %v396 = vld [vmem:[#allocation8 + $0x1c] sm:$0xf]
      %v397 = vld [vmem:[#allocation8 + $0x20] sm:$0xf]
      %v398 = vld [vmem:[#allocation8 + $0x24] sm:$0xf]
      %v399 = vld [vmem:[#allocation8 + $0x28] sm:$0xf]
      %v400 = vld [vmem:[#allocation8 + $0x2c] sm:$0xf]
      %v401 = vld [vmem:[#allocation8 + $0x30] sm:$0xf]
      %v402 = vld [vmem:[#allocation8 + $0x34] sm:$0xf]
      %v403 = vld [vmem:[#allocation8 + $0x38] sm:$0xf]
      %v404 = vld [vmem:[#allocation8 + $0x3c] sm:$0xf]
      %v405 = vunpack.c.l.bf16 %v389
      %v406 = vunpack.c.l.bf16 %v390
      %v407 = vunpack.c.l.bf16 %v391
      %v408 = vunpack.c.l.bf16 %v392
      %v409 = vunpack.c.l.bf16 %v393
      %v410 = vunpack.c.l.bf16 %v394
      %v411 = vunpack.c.l.bf16 %v395
      %v412 = vunpack.c.l.bf16 %v396
      %v413 = vunpack.c.l.bf16 %v397
      %v414 = vunpack.c.l.bf16 %v398
      %v415 = vunpack.c.l.bf16 %v399
      %v416 = vunpack.c.l.bf16 %v400
      %v417 = vunpack.c.l.bf16 %v401
      %v418 = vunpack.c.l.bf16 %v402
      %v419 = vunpack.c.l.bf16 %v403
      %v420 = vunpack.c.l.bf16 %v404
      %v421 = vld [vmem:[#allocation9] sm:$0xff]
      %v422 = vld [vmem:[#allocation9 + $0x8] sm:$0xff]
      %v423 = vld [vmem:[#allocation9 + $0x10] sm:$0xff]
      %v424 = vld [vmem:[#allocation9 + $0x18] sm:$0xff]
      %v425 = vld [vmem:[#allocation9 + $0x20] sm:$0xff]
      %v426 = vld [vmem:[#allocation9 + $0x28] sm:$0xff]
      %v427 = vld [vmem:[#allocation9 + $0x30] sm:$0xff]
      %v428 = vld [vmem:[#allocation9 + $0x38] sm:$0xff]
      %v429 = vld [vmem:[#allocation9 + $0x40] sm:$0xff]
      %v430 = vld [vmem:[#allocation9 + $0x48] sm:$0xff]
      %v431 = vld [vmem:[#allocation9 + $0x50] sm:$0xff]
      %v432 = vld [vmem:[#allocation9 + $0x58] sm:$0xff]
      %v433 = vld [vmem:[#allocation9 + $0x60] sm:$0xff]
      %v434 = vld [vmem:[#allocation9 + $0x68] sm:$0xff]
      %v435 = vld [vmem:[#allocation9 + $0x70] sm:$0xff]
      %v436 = vld [vmem:[#allocation9 + $0x78] sm:$0xff]
      %v437 = vld [vmem:[#allocation2] sm:$0xff]
      %v438 = vld [vmem:[#allocation2 + $0x8] sm:$0xff]
      %v439 = vld [vmem:[#allocation2 + $0x10] sm:$0xff]
      %v440 = vld [vmem:[#allocation2 + $0x18] sm:$0xff]
      %v441 = vld [vmem:[#allocation2 + $0x20] sm:$0xff]
      %v442 = vld [vmem:[#allocation2 + $0x28] sm:$0xff]
      %v443 = vld [vmem:[#allocation2 + $0x30] sm:$0xff]
      %v444 = vld [vmem:[#allocation2 + $0x38] sm:$0xff]
      %v445 = vld [vmem:[#allocation2 + $0x40] sm:$0xff]
      %v446 = vld [vmem:[#allocation2 + $0x48] sm:$0xff]
      %v447 = vld [vmem:[#allocation2 + $0x50] sm:$0xff]
      %v448 = vld [vmem:[#allocation2 + $0x58] sm:$0xff]
      %v449 = vld [vmem:[#allocation2 + $0x60] sm:$0xff]
      %v450 = vld [vmem:[#allocation2 + $0x68] sm:$0xff]
      %v451 = vld [vmem:[#allocation2 + $0x70] sm:$0xff]
      %v452 = vld [vmem:[#allocation2 + $0x78] sm:$0xff]
      %v453 = vld [vmem:[#allocation11] sm:$0xff]
      %v454 = vld [vmem:[#allocation11 + $0x8] sm:$0xff]
      %v455 = vld [vmem:[#allocation11 + $0x10] sm:$0xff]
      %v456 = vld [vmem:[#allocation11 + $0x18] sm:$0xff]
      %v457 = vld [vmem:[#allocation11 + $0x20] sm:$0xff]
      %v458 = vld [vmem:[#allocation11 + $0x28] sm:$0xff]
      %v459 = vld [vmem:[#allocation11 + $0x30] sm:$0xff]
      %v460 = vld [vmem:[#allocation11 + $0x38] sm:$0xff]
      %v461 = vld [vmem:[#allocation11 + $0x40] sm:$0xff]
      %v462 = vld [vmem:[#allocation11 + $0x48] sm:$0xff]
      %v463 = vld [vmem:[#allocation11 + $0x50] sm:$0xff]
      %v464 = vld [vmem:[#allocation11 + $0x58] sm:$0xff]
      %v465 = vld [vmem:[#allocation11 + $0x60] sm:$0xff]
      %v466 = vld [vmem:[#allocation11 + $0x68] sm:$0xff]
      %v467 = vld [vmem:[#allocation11 + $0x70] sm:$0xff]
      %v468 = vld [vmem:[#allocation11 + $0x78] sm:$0xff]
      %469 = vmatprep.subr.mxu0 0.0
      %470 = vmatpush1.msra.mxu0 %v468
      %471 = vmatprep.subr.mxu0 0.0
      %472 = vmatpush1.msra.mxu0 %v467
      %473 = vmatprep.subr.mxu0 0.0
      %474 = vmatpush1.msra.mxu0 %v466
      %475 = vmatprep.subr.mxu0 0.0
      %476 = vmatpush1.msra.mxu0 %v465
      %477 = vmatprep.subr.mxu0 0.0
      %478 = vmatpush1.msra.mxu0 %v464
      %479 = vmatprep.subr.mxu0 0.0
      %480 = vmatpush1.msra.mxu0 %v463
      %481 = vmatprep.subr.mxu0 0.0
      %482 = vmatpush1.msra.mxu0 %v462
      %483 = vmatprep.subr.mxu0 0.0
      %484 = vmatpush1.msra.mxu0 %v461
      %485 = vmatprep.subr.mxu0 0.0
      %486 = vmatpush1.msra.mxu0 %v460
      %487 = vmatprep.subr.mxu0 0.0
      %488 = vmatpush1.msra.mxu0 %v459
      %489 = vmatprep.subr.mxu0 0.0
      %490 = vmatpush1.msra.mxu0 %v458
      %491 = vmatprep.subr.mxu0 0.0
      %492 = vmatpush1.msra.mxu0 %v457
      %493 = vmatprep.subr.mxu0 0.0
      %494 = vmatpush1.msra.mxu0 %v456
      %495 = vmatprep.subr.mxu0 0.0
      %496 = vmatpush1.msra.mxu0 %v455
      %497 = vmatprep.subr.mxu0 0.0
      %498 = vmatpush1.msra.mxu0 %v454
      %499 = vmatprep.subr.mxu0 0.0
      %500 = vmatpush1.msra.mxu0 %v453
      %501 = vmatprep.subr.mxu0 0.0
      %502 = vmatpush2.msra.mxu0 0.0
      %503 = vmatprep.subr.mxu0 0.0
      %504 = vmatpush2.msra.mxu0 0.0
      %505 = vmatprep.subr.mxu0 0.0
      %506 = vmatpush2.msra.mxu0 0.0
      %507 = vmatprep.subr.mxu0 0.0
      %508 = vmatpush2.msra.mxu0 0.0
      %509 = vmatprep.subr.mxu0 0.0
      %510 = vmatpush2.msra.mxu0 0.0
      %511 = vmatprep.subr.mxu0 0.0
      %512 = vmatpush2.msra.mxu0 0.0
      %513 = vmatprep.subr.mxu0 0.0
      %514 = vmatpush2.msra.mxu0 0.0
      %515 = vmatprep.subr.mxu0 0.0
      %516 = vmatpush2.msra.mxu0 0.0
      %517 = vmatprep.subr.mxu0 0.0
      %518 = vmatpush2.msra.mxu0 0.0
      %519 = vmatprep.subr.mxu0 0.0
      %520 = vmatpush2.msra.mxu0 0.0
      %521 = vmatprep.subr.mxu0 0.0
      %522 = vmatpush2.msra.mxu0 0.0
      %523 = vmatprep.subr.mxu0 0.0
      %524 = vmatpush2.msra.mxu0 0.0
      %525 = vmatprep.subr.mxu0 0.0
      %526 = vmatpush2.msra.mxu0 0.0
      %527 = vmatprep.subr.mxu0 0.0
      %528 = vmatpush2.msra.mxu0 0.0
      %529 = vmatprep.subr.mxu0 0.0
      %530 = vmatpush2.msra.mxu0 0.0
      %531 = vmatprep.subr.mxu0 0.0
      %532 = vmatpush2.msra.mxu0 0.0
      %533 = vmatprep.mubr.f32.mxu0 0.0
      %534 = vmatmul.mubr.f32.gmra.mxu0 %v437
      %v535 = vpop.f32.mrf.mxu0
      %v536 = vadd.f32 0.0, %v535
      %v537 = vpop.f32.mrf.mxu0
      %538 = vmatprep.mubr.f32.mxu0 0.0
      %539 = vmatmul.mubr.f32.gmra.mxu0 %v438
      %v540 = vpop.f32.mrf.mxu0
      %v541 = vadd.f32 0.0, %v540
      %v542 = vpop.f32.mrf.mxu0
      %543 = vmatprep.mubr.f32.mxu0 0.0
      %544 = vmatmul.mubr.f32.gmra.mxu0 %v439
      %v545 = vpop.f32.mrf.mxu0
      %v546 = vadd.f32 0.0, %v545
      %v547 = vpop.f32.mrf.mxu0
      %548 = vmatprep.mubr.f32.mxu0 0.0
      %549 = vmatmul.mubr.f32.gmra.mxu0 %v440
      %v550 = vpop.f32.mrf.mxu0
      %v551 = vadd.f32 0.0, %v550
      %v552 = vpop.f32.mrf.mxu0
      %553 = vmatprep.mubr.f32.mxu0 0.0
      %554 = vmatmul.mubr.f32.gmra.mxu0 %v441
      %v555 = vpop.f32.mrf.mxu0
      %v556 = vadd.f32 0.0, %v555
      %v557 = vpop.f32.mrf.mxu0
      %558 = vmatprep.mubr.f32.mxu0 0.0
      %559 = vmatmul.mubr.f32.gmra.mxu0 %v442
      %v560 = vpop.f32.mrf.mxu0
      %v561 = vadd.f32 0.0, %v560
      %v562 = vpop.f32.mrf.mxu0
      %563 = vmatprep.mubr.f32.mxu0 0.0
      %564 = vmatmul.mubr.f32.gmra.mxu0 %v443
      %v565 = vpop.f32.mrf.mxu0
      %v566 = vadd.f32 0.0, %v565
      %v567 = vpop.f32.mrf.mxu0
      %568 = vmatprep.mubr.f32.mxu0 0.0
      %569 = vmatmul.mubr.f32.gmra.mxu0 %v444
      %v570 = vpop.f32.mrf.mxu0
      %v571 = vadd.f32 0.0, %v570
      %v572 = vpop.f32.mrf.mxu0
      %573 = vmatprep.mubr.f32.mxu0 0.0
      %574 = vmatmul.mubr.f32.gmra.mxu0 %v445
      %v575 = vpop.f32.mrf.mxu0
      %v576 = vadd.f32 0.0, %v575
      %v577 = vpop.f32.mrf.mxu0
      %578 = vmatprep.mubr.f32.mxu0 0.0
      %579 = vmatmul.mubr.f32.gmra.mxu0 %v446
      %v580 = vpop.f32.mrf.mxu0
      %v581 = vadd.f32 0.0, %v580
      %v582 = vpop.f32.mrf.mxu0
      %583 = vmatprep.mubr.f32.mxu0 0.0
      %584 = vmatmul.mubr.f32.gmra.mxu0 %v447
      %v585 = vpop.f32.mrf.mxu0
      %v586 = vadd.f32 0.0, %v585
      %v587 = vpop.f32.mrf.mxu0
      %588 = vmatprep.mubr.f32.mxu0 0.0
      %589 = vmatmul.mubr.f32.gmra.mxu0 %v448
      %v590 = vpop.f32.mrf.mxu0
      %v591 = vadd.f32 0.0, %v590
      %v592 = vpop.f32.mrf.mxu0
      %593 = vmatprep.mubr.f32.mxu0 0.0
      %594 = vmatmul.mubr.f32.gmra.mxu0 %v449
      %v595 = vpop.f32.mrf.mxu0
      %v596 = vadd.f32 0.0, %v595
      %v597 = vpop.f32.mrf.mxu0
      %598 = vmatprep.mubr.f32.mxu0 0.0
      %599 = vmatmul.mubr.f32.gmra.mxu0 %v450
      %v600 = vpop.f32.mrf.mxu0
      %v601 = vadd.f32 0.0, %v600
      %v602 = vpop.f32.mrf.mxu0
      %603 = vmatprep.mubr.f32.mxu0 0.0
      %604 = vmatmul.mubr.f32.gmra.mxu0 %v451
      %v605 = vpop.f32.mrf.mxu0
      %v606 = vadd.f32 0.0, %v605
      %v607 = vpop.f32.mrf.mxu0
      %608 = vmatprep.mubr.f32.mxu0 0.0
      %609 = vmatmul.mubr.f32.gmra.mxu0 %v452
      %v610 = vpop.f32.mrf.mxu0
      %v611 = vadd.f32 0.0, %v610
      %v612 = vpop.f32.mrf.mxu0
      %613 = vdwg.mxu0
      %614 = vmatprep.subr.mxu0 0.0
      %615 = vmatpush1.msra.mxu0 %v436
      %616 = vmatprep.subr.mxu0 0.0
      %617 = vmatpush1.msra.mxu0 %v435
      %618 = vmatprep.subr.mxu0 0.0
      %619 = vmatpush1.msra.mxu0 %v434
      %620 = vmatprep.subr.mxu0 0.0
      %621 = vmatpush1.msra.mxu0 %v433
      %622 = vmatprep.subr.mxu0 0.0
      %623 = vmatpush1.msra.mxu0 %v432
      %624 = vmatprep.subr.mxu0 0.0
      %625 = vmatpush1.msra.mxu0 %v431
      %626 = vmatprep.subr.mxu0 0.0
      %627 = vmatpush1.msra.mxu0 %v430
      %628 = vmatprep.subr.mxu0 0.0
      %629 = vmatpush1.msra.mxu0 %v429
      %630 = vmatprep.subr.mxu0 0.0
      %631 = vmatpush1.msra.mxu0 %v428
      %632 = vmatprep.subr.mxu0 0.0
      %633 = vmatpush1.msra.mxu0 %v427
      %634 = vmatprep.subr.mxu0 0.0
      %635 = vmatpush1.msra.mxu0 %v426
      %636 = vmatprep.subr.mxu0 0.0
      %637 = vmatpush1.msra.mxu0 %v425
      %638 = vmatprep.subr.mxu0 0.0
      %639 = vmatpush1.msra.mxu0 %v424
      %640 = vmatprep.subr.mxu0 0.0
      %641 = vmatpush1.msra.mxu0 %v423
      %642 = vmatprep.subr.mxu0 0.0
      %643 = vmatpush1.msra.mxu0 %v422
      %644 = vmatprep.subr.mxu0 0.0
      %645 = vmatpush1.msra.mxu0 %v421
      %646 = vmatprep.subr.mxu0 0.0
      %647 = vmatpush2.msra.mxu0 0.0
      %648 = vmatprep.subr.mxu0 0.0
      %649 = vmatpush2.msra.mxu0 0.0
      %650 = vmatprep.subr.mxu0 0.0
      %651 = vmatpush2.msra.mxu0 0.0
      %652 = vmatprep.subr.mxu0 0.0
      %653 = vmatpush2.msra.mxu0 0.0
      %654 = vmatprep.subr.mxu0 0.0
      %655 = vmatpush2.msra.mxu0 0.0
      %656 = vmatprep.subr.mxu0 0.0
      %657 = vmatpush2.msra.mxu0 0.0
      %658 = vmatprep.subr.mxu0 0.0
      %659 = vmatpush2.msra.mxu0 0.0
      %660 = vmatprep.subr.mxu0 0.0
      %661 = vmatpush2.msra.mxu0 0.0
      %662 = vmatprep.subr.mxu0 0.0
      %663 = vmatpush2.msra.mxu0 0.0
      %664 = vmatprep.subr.mxu0 0.0
      %665 = vmatpush2.msra.mxu0 0.0
      %666 = vmatprep.subr.mxu0 0.0
      %667 = vmatpush2.msra.mxu0 0.0
      %668 = vmatprep.subr.mxu0 0.0
      %669 = vmatpush2.msra.mxu0 0.0
      %670 = vmatprep.subr.mxu0 0.0
      %671 = vmatpush2.msra.mxu0 0.0
      %672 = vmatprep.subr.mxu0 0.0
      %673 = vmatpush2.msra.mxu0 0.0
      %674 = vmatprep.subr.mxu0 0.0
      %675 = vmatpush2.msra.mxu0 0.0
      %676 = vmatprep.subr.mxu0 0.0
      %677 = vmatpush2.msra.mxu0 0.0
      %678 = vmatprep.mubr.f32.mxu0 0.0
      %679 = vmatmul.mubr.f32.gmra.mxu0 %v405
      %v680 = vpop.f32.mrf.mxu0
      %v681 = vadd.f32 %v536, %v680
      %v682 = vpop.f32.mrf.mxu0
      %683 = vmatprep.mubr.f32.mxu0 0.0
      %684 = vmatmul.mubr.f32.gmra.mxu0 %v406
      %v685 = vpop.f32.mrf.mxu0
      %v686 = vadd.f32 %v541, %v685
      %v687 = vpop.f32.mrf.mxu0
      %688 = vmatprep.mubr.f32.mxu0 0.0
      %689 = vmatmul.mubr.f32.gmra.mxu0 %v407
      %v690 = vpop.f32.mrf.mxu0
      %v691 = vadd.f32 %v546, %v690
      %v692 = vpop.f32.mrf.mxu0
      %693 = vmatprep.mubr.f32.mxu0 0.0
      %694 = vmatmul.mubr.f32.gmra.mxu0 %v408
      %v695 = vpop.f32.mrf.mxu0
      %v696 = vadd.f32 %v551, %v695
      %v697 = vpop.f32.mrf.mxu0
      %698 = vmatprep.mubr.f32.mxu0 0.0
      %699 = vmatmul.mubr.f32.gmra.mxu0 %v409
      %v700 = vpop.f32.mrf.mxu0
      %v701 = vadd.f32 %v556, %v700
      %v702 = vpop.f32.mrf.mxu0
      %703 = vmatprep.mubr.f32.mxu0 0.0
      %704 = vmatmul.mubr.f32.gmra.mxu0 %v410
      %v705 = vpop.f32.mrf.mxu0
      %v706 = vadd.f32 %v561, %v705
      %v707 = vpop.f32.mrf.mxu0
      %708 = vmatprep.mubr.f32.mxu0 0.0
      %709 = vmatmul.mubr.f32.gmra.mxu0 %v411
      %v710 = vpop.f32.mrf.mxu0
      %v711 = vadd.f32 %v566, %v710
      %v712 = vpop.f32.mrf.mxu0
      %713 = vmatprep.mubr.f32.mxu0 0.0
      %714 = vmatmul.mubr.f32.gmra.mxu0 %v412
      %v715 = vpop.f32.mrf.mxu0
      %v716 = vadd.f32 %v571, %v715
      %v717 = vpop.f32.mrf.mxu0
      %718 = vmatprep.mubr.f32.mxu0 0.0
      %719 = vmatmul.mubr.f32.gmra.mxu0 %v413
      %v720 = vpop.f32.mrf.mxu0
      %v721 = vadd.f32 %v576, %v720
      %v722 = vpop.f32.mrf.mxu0
      %723 = vmatprep.mubr.f32.mxu0 0.0
      %724 = vmatmul.mubr.f32.gmra.mxu0 %v414
      %v725 = vpop.f32.mrf.mxu0
      %v726 = vadd.f32 %v581, %v725
      %v727 = vpop.f32.mrf.mxu0
      %728 = vmatprep.mubr.f32.mxu0 0.0
      %729 = vmatmul.mubr.f32.gmra.mxu0 %v415
      %v730 = vpop.f32.mrf.mxu0
      %v731 = vadd.f32 %v586, %v730
      %v732 = vpop.f32.mrf.mxu0
      %733 = vmatprep.mubr.f32.mxu0 0.0
      %734 = vmatmul.mubr.f32.gmra.mxu0 %v416
      %v735 = vpop.f32.mrf.mxu0
      %v736 = vadd.f32 %v591, %v735
      %v737 = vpop.f32.mrf.mxu0
      %738 = vmatprep.mubr.f32.mxu0 0.0
      %739 = vmatmul.mubr.f32.gmra.mxu0 %v417
      %v740 = vpop.f32.mrf.mxu0
      %v741 = vadd.f32 %v596, %v740
      %v742 = vpop.f32.mrf.mxu0
      %743 = vmatprep.mubr.f32.mxu0 0.0
      %744 = vmatmul.mubr.f32.gmra.mxu0 %v418
      %v745 = vpop.f32.mrf.mxu0
      %v746 = vadd.f32 %v601, %v745
      %v747 = vpop.f32.mrf.mxu0
      %748 = vmatprep.mubr.f32.mxu0 0.0
      %749 = vmatmul.mubr.f32.gmra.mxu0 %v419
      %v750 = vpop.f32.mrf.mxu0
      %v751 = vadd.f32 %v606, %v750
      %v752 = vpop.f32.mrf.mxu0
      %753 = vmatprep.mubr.f32.mxu0 0.0
      %754 = vmatmul.mubr.f32.gmra.mxu0 %v420
      %v755 = vpop.f32.mrf.mxu0
      %v756 = vadd.f32 %v611, %v755
      %v757 = vpop.f32.mrf.mxu0
      %758 = vdwg.mxu0
      %v759 = vld [vmem:[%s5] sm:$0x1]
      %v761 = vlaneseq
      %v762 = vshrl.u32 %v761, 7
      %v763 = vsub.s32 0, %v762
      %v764 = vrot.slane %v759, %v763
      %v766 = vadd.f32 %v681, %v764
      %v767 = vadd.f32 %v686, %v764
      %v768 = vadd.f32 %v691, %v764
      %v769 = vadd.f32 %v696, %v764
      %v770 = vadd.f32 %v701, %v764
      %v771 = vadd.f32 %v706, %v764
      %v772 = vadd.f32 %v711, %v764
      %v773 = vadd.f32 %v716, %v764
      %v774 = vadd.f32 %v721, %v764
      %v775 = vadd.f32 %v726, %v764
      %v776 = vadd.f32 %v731, %v764
      %v777 = vadd.f32 %v736, %v764
      %v778 = vadd.f32 %v741, %v764
      %v779 = vadd.f32 %v746, %v764
      %v780 = vadd.f32 %v751, %v764
      %v781 = vadd.f32 %v756, %v764
      %v782 = vmax.f32 %v766, 0.0
      %v783 = vmax.f32 %v767, 0.0
      %v784 = vmax.f32 %v768, 0.0
      %v785 = vmax.f32 %v769, 0.0
      %v786 = vmax.f32 %v770, 0.0
      %v787 = vmax.f32 %v771, 0.0
      %v788 = vmax.f32 %v772, 0.0
      %v789 = vmax.f32 %v773, 0.0
      %v790 = vmax.f32 %v774, 0.0
      %v791 = vmax.f32 %v775, 0.0
      %v792 = vmax.f32 %v776, 0.0
      %v793 = vmax.f32 %v777, 0.0
      %v794 = vmax.f32 %v778, 0.0
      %v795 = vmax.f32 %v779, 0.0
      %v796 = vmax.f32 %v780, 0.0
      %v797 = vmax.f32 %v781, 0.0
      %v798 = vpack.c.bf16 %v783, %v782
      %v799 = vpack.c.bf16 %v785, %v784
      %v800 = vpack.c.bf16 %v787, %v786
      %v801 = vpack.c.bf16 %v789, %v788
      %v802 = vpack.c.bf16 %v791, %v790
      %v803 = vpack.c.bf16 %v793, %v792
      %v804 = vpack.c.bf16 %v795, %v794
      %v805 = vpack.c.bf16 %v797, %v796
      %v814 = vunpack.c.l.b16 %v798
      %v815 = vunpack.c.h.b16 %v798
      %v816 = vunpack.c.l.b16 %v799
      %v817 = vunpack.c.h.b16 %v799
      %v818 = vunpack.c.l.b16 %v800
      %v819 = vunpack.c.h.b16 %v800
      %v820 = vunpack.c.l.b16 %v801
      %v821 = vunpack.c.h.b16 %v801
      %v822 = vunpack.c.l.b16 %v802
      %v823 = vunpack.c.h.b16 %v802
      %v824 = vunpack.c.l.b16 %v803
      %v825 = vunpack.c.h.b16 %v803
      %v826 = vunpack.c.l.b16 %v804
      %v827 = vunpack.c.h.b16 %v804
      %v828 = vunpack.c.l.b16 %v805
      %v829 = vunpack.c.h.b16 %v805
      %v830 = vpack.c.b16 %v814, %v814
      %v831 = vpack.c.b16 %v815, %v815
      %v832 = vpack.c.b16 %v816, %v816
      %v833 = vpack.c.b16 %v817, %v817
      %v834 = vpack.c.b16 %v818, %v818
      %v835 = vpack.c.b16 %v819, %v819
      %v836 = vpack.c.b16 %v820, %v820
      %v837 = vpack.c.b16 %v821, %v821
      %v838 = vpack.c.b16 %v822, %v822
      %v839 = vpack.c.b16 %v823, %v823
      %v840 = vpack.c.b16 %v824, %v824
      %v841 = vpack.c.b16 %v825, %v825
      %v842 = vpack.c.b16 %v826, %v826
      %v843 = vpack.c.b16 %v827, %v827
      %v844 = vpack.c.b16 %v828, %v828
      %v845 = vpack.c.b16 %v829, %v829
      %862 = vst [vmem:[#allocation12] sm:$0xf] %v830
      %863 = vst [vmem:[#allocation12 + $0x4] sm:$0xf] %v831
      %864 = vst [vmem:[#allocation12 + $0x8] sm:$0xf] %v832
      %865 = vst [vmem:[#allocation12 + $0xc] sm:$0xf] %v833
      %866 = vst [vmem:[#allocation12 + $0x10] sm:$0xf] %v834
      %867 = vst [vmem:[#allocation12 + $0x14] sm:$0xf] %v835
      %868 = vst [vmem:[#allocation12 + $0x18] sm:$0xf] %v836
      %869 = vst [vmem:[#allocation12 + $0x1c] sm:$0xf] %v837
      %870 = vst [vmem:[#allocation12 + $0x20] sm:$0xf] %v838
      %871 = vst [vmem:[#allocation12 + $0x24] sm:$0xf] %v839
      %872 = vst [vmem:[#allocation12 + $0x28] sm:$0xf] %v840
      %873 = vst [vmem:[#allocation12 + $0x2c] sm:$0xf] %v841
      %874 = vst [vmem:[#allocation12 + $0x30] sm:$0xf] %v842
      %875 = vst [vmem:[#allocation12 + $0x34] sm:$0xf] %v843
      %876 = vst [vmem:[#allocation12 + $0x38] sm:$0xf] %v844
      %877 = vst [vmem:[#allocation12 + $0x3c] sm:$0xf] %v845
    $region53: #{tpu_custom_call.1} parent=1 // pred_fallthru
      _
    // Predicated region
    $region54: #{tpu_custom_call.1} parent=1 // pred_check
      _
    $region55: #{tpu_custom_call.1} parent=1 // pred_check_branch
      %879 = sbr.rel (0) target = $region57
    $region56: #{tpu_custom_call.1} parent=1 // pred_region
      %s881 = ssub.s32 1024, 1024
      %882 = vsyncadd [#allocation5], %s881
      %s883 = sshll.u32 [#allocation12], 4
      %s884 = int_to_ptr.vmem [resolvable:$true] %s883
      %889 = dma.vmem_to_hbm [thread:$0]  %s884, 1024, %s6, [#allocation5], 64, 64, 4
    $region57: #{tpu_custom_call.1} parent=1 // pred_fallthru
      _
    // Predicated region
    $region58: #{tpu_custom_call.1} parent=1 // pred_check
      _
    $region59: #{tpu_custom_call.1} parent=1 // pred_check_branch
      %891 = sbr.rel (0) target = $region61
    $region60: #{tpu_custom_call.1} parent=1 // pred_region
      %892 = dma.done [#allocation5], 1024
    $region61: #{tpu_custom_call.1} parent=1 // pred_fallthru
      _
    %893 = vsyncpa [#allocation4], 1
    %894 = vsyncpa [#allocation7], 1
    %895 = vsyncpa [#allocation10], 1
    %896 = vsyncpa [#allocation5], 1

</llo_original>
